<compile_context>
chip_gen: v5e
topology: v5e:2x2
jax: 0.10.0
libtpu: 0.0.40
codegen_flags: <defaults>
</compile_context>

<pallas_src>
import functools
import numpy as np
import jax
import jax.numpy as jnp
from jax.experimental import pallas as pl
from jax.experimental.pallas import tpu as pltpu


def _round_up(x, m):
    return -(-x // m) * m


# ----------------------------- Pallas kernel ---------------------------------
def _patch_embed_kernel(*refs, has_norm, eps, e_real):
    # without norm: (cols_ref, w_ref, b_ref, o_ref)
    # with norm:    (cols_ref, w_ref, b_ref, gamma_ref, beta_ref, o_ref)
    if has_norm:
        cols_ref, w_ref, b_ref, g_ref, beta_ref, o_ref = refs
    else:
        cols_ref, w_ref, b_ref, o_ref = refs

    # Patch projection on the MXU: (tm, K) @ (K, E_pad) with f32 accumulation.
    y = jnp.dot(cols_ref[...], w_ref[...], preferred_element_type=jnp.float32)
    y = y + b_ref[...]                                   # (tm, E_pad) + (1, E_pad)

    if has_norm:
        e_pad = y.shape[-1]
        if e_pad == e_real:
            mu = jnp.mean(y, axis=-1, keepdims=True)
            d = y - mu
            var = jnp.mean(d * d, axis=-1, keepdims=True)
        else:
            # Embedding axis was zero-padded for lane-dense stores; mask the
            # padded lanes out of the LayerNorm statistics (exact semantics).
            lane = jax.lax.broadcasted_iota(jnp.int32, y.shape, 1)
            mask = lane < e_real
            mu = jnp.sum(jnp.where(mask, y, 0.0), axis=-1, keepdims=True) / e_real
            d = jnp.where(mask, y - mu, 0.0)
            var = jnp.sum(d * d, axis=-1, keepdims=True) / e_real
        y = (y - mu) * jax.lax.rsqrt(var + eps)          # rsqrt -> EUP slot
        y = y * g_ref[...] + beta_ref[...]               # padded lanes: gamma=beta=0

    o_ref[...] = y.astype(o_ref.dtype)


# ------------------------------ tiling helper ---------------------------------
def _pick_row_tile(M, K, E_pad, in_bytes, out_bytes=4,
                   vmem_budget=12 << 20, cap=1024):
    """Pick the token-axis tile: largest multiple of 8 that fits the VMEM budget
    (double-buffered cols + output tiles, resident weight), capped, and keep the
    grid >= 2 steps when there are enough rows (v7x megacore sharding)."""
    per_row = 2 * (K * in_bytes + E_pad * out_bytes)     # double-buffered in/out rows
    fixed = 2 * K * E_pad * in_bytes + 6 * E_pad * 4     # weight + bias/gamma/beta
    avail = max(vmem_budget - fixed, 8 * per_row)
    tm = min(cap, int(avail // per_row))
    tm = max(8, (tm // 8) * 8)
    m8 = _round_up(M, 8)
    tm = min(tm, m8)
    if _round_up(M, tm) // tm < 2 and m8 >= 16:          # prefer >= 2 grid steps
        tm = max(8, (_round_up(m8 // 2, 8) // 8) * 8)
    return tm


# --------------------------------- wrapper ------------------------------------
def patch_embed(x, w_conv, b_conv, *, patch_size, norm_weight=None,
                norm_bias=None, eps=1e-5, compute_dtype=jnp.float32):
    """Pallas PatchEmbed forward.

    x:       (B, C, H, W) float32
    w_conv:  (E, C, P, P)  Conv2d weight (PyTorch layout)
    b_conv:  (E,)          Conv2d bias
    norm_weight/norm_bias: optional (E,) LayerNorm affine params
    compute_dtype: dtype fed to the MXU (jnp.bfloat16 recommended on v6e/v7x);
                   accumulation is always f32.
    Returns (tokens, Hp, Wp) with tokens shaped (B, Hp*Wp, E).
    """
    B, C, H, W = x.shape
    P = patch_size
    assert H % P == 0 and W % P == 0, "image size must be divisible by patch size"
    Hp, Wp = H // P, W // P
    E = w_conv.shape[0]
    K = C * P * P
    M = B * Hp * Wp

    # im2col for non-overlapping patches (layout plumbing only):
    # (B, C, Hp, P, Wp, P) -> (B, Hp, Wp, C, Ph, Pw) -> (M, K), K flattened (c, ph, pw)
    cols = x.reshape(B, C, Hp, P, Wp, P).transpose(0, 2, 4, 1, 3, 5).reshape(M, K)
    w_mat = w_conv.reshape(E, K).T                       # (K, E): y = cols @ w_mat + b

    # Lane-dense output: pad the embedding axis to a multiple of 128.
    E_pad = _round_up(E, 128)
    if E_pad != E:
        w_mat = jnp.pad(w_mat, ((0, 0), (0, E_pad - E)))
        b_vec = jnp.pad(b_conv, (0, E_pad - E))
    else:
        b_vec = b_conv
    b_row = b_vec.reshape(1, E_pad).astype(jnp.float32)

    in_bytes = np.dtype(compute_dtype).itemsize
    tm = _pick_row_tile(M, K, E_pad, in_bytes)
    Mpad = _round_up(M, tm)
    if Mpad != M:
        cols = jnp.pad(cols, ((0, Mpad - M), (0, 0)))

    cols = cols.astype(compute_dtype)
    w_mat = w_mat.astype(compute_dtype)

    grid = (Mpad // tm,)
    has_norm = norm_weight is not None

    in_specs = [
        pl.BlockSpec((tm, K), lambda i: (i, 0)),         # patch columns (row-tiled)
        pl.BlockSpec((K, E_pad), lambda i: (0, 0)),      # weight: VMEM-resident
        pl.BlockSpec((1, E_pad), lambda i: (0, 0)),      # bias:   VMEM-resident
    ]
    args = [cols, w_mat, b_row]
    if has_norm:
        gamma = norm_weight
        beta = norm_bias
        if E_pad != E:
            gamma = jnp.pad(gamma, (0, E_pad - E))       # padded lanes -> 0
            beta = jnp.pad(beta, (0, E_pad - E))
        in_specs += [pl.BlockSpec((1, E_pad), lambda i: (0, 0)),
                     pl.BlockSpec((1, E_pad), lambda i: (0, 0))]
        args += [gamma.reshape(1, E_pad).astype(jnp.float32),
                 beta.reshape(1, E_pad).astype(jnp.float32)]

    kernel = functools.partial(_patch_embed_kernel, has_norm=has_norm,
                               eps=eps, e_real=E)

    out = pl.pallas_call(
        kernel,
        out_shape=jax.ShapeDtypeStruct((Mpad, E_pad), jnp.float32),
        grid_spec=pltpu.PrefetchScalarGridSpec(
            num_scalar_prefetch=0,
            grid=grid,
            in_specs=in_specs,
            out_specs=pl.BlockSpec((tm, E_pad), lambda i: (i, 0)),
        ),
        compiler_params=pltpu.CompilerParams(
            dimension_semantics=("parallel",)),
    )(*args)

    out = out[:M, :E]
    return out.reshape(B, Hp * Wp, E), Hp, Wp


# ------------------------------ pure-JAX reference -----------------------------
def ref_patch_embed(x, w_conv, b_conv, *, patch_size, norm_weight=None,
                    norm_bias=None, eps=1e-5):
    y = jax.lax.conv_general_dilated(
        x, w_conv, window_strides=(patch_size, patch_size), padding="VALID",
        dimension_numbers=("NCHW", "OIHW", "NCHW"))
    y = y + b_conv.reshape(1, -1, 1, 1)
    B, E, Hp, Wp = y.shape
    y = y.reshape(B, E, Hp * Wp).transpose(0, 2, 1)      # flatten(2).transpose(1, 2)
    if norm_weight is not None:
        mu = y.mean(-1, keepdims=True)
        var = ((y - mu) ** 2).mean(-1, keepdims=True)
        y = (y - mu) / jnp.sqrt(var + eps) * norm_weight + norm_bias
    return y, Hp, Wp


# ----------------------------------- main --------------------------------------
if __name__ == "__main__":
    img_size = 32
    patch_size = 4
    in_chans = 3
    B = 2                                   # M = B * (32/4)^2 = 128 tokens

    key = jax.random.PRNGKey(0)
    kx, kw, kb, kg, kbeta, kw2, kb2 = jax.random.split(key, 7)

    x = jax.random.normal(kx, (B, in_chans, img_size, img_size), dtype=jnp.float32)
    fan_in = in_chans * patch_size * patch_size

    # --- embed_dim = 96 (Swin default, exercises the E->128 padding path) -----
    embed_dim = 96
    w_conv = (1.0 / np.sqrt(fan_in)) * jax.random.normal(
        kw, (embed_dim, in_chans, patch_size, patch_size), dtype=jnp.float32)
    b_conv = 0.05 * jax.random.normal(kb, (embed_dim,), dtype=jnp.float32)

    # 1) Default path: norm_layer=None (matches PatchEmbed defaults).
    out, Hp, Wp = patch_embed(x, w_conv, b_conv, patch_size=patch_size)
    out = jax.block_until_ready(out)
    ref, Hr, Wr = ref_patch_embed(x, w_conv, b_conv, patch_size=patch_size)
    assert (Hp, Wp) == (Hr, Wr) == (img_size // patch_size, img_size // patch_size)
    np.testing.assert_allclose(np.asarray(out), np.asarray(ref), rtol=1e-4, atol=1e-4)

    # 2) Optional LayerNorm path (patch_norm=True), masked stats over padded lanes.
    gamma = 1.0 + 0.05 * jax.random.normal(kg, (embed_dim,), dtype=jnp.float32)
    beta = 0.05 * jax.random.normal(kbeta, (embed_dim,), dtype=jnp.float32)
    out_ln, _, _ = patch_embed(x, w_conv, b_conv, patch_size=patch_size,
                               norm_weight=gamma, norm_bias=beta)
    out_ln = jax.block_until_ready(out_ln)
    ref_ln, _, _ = ref_patch_embed(x, w_conv, b_conv, patch_size=patch_size,
                                   norm_weight=gamma, norm_bias=beta)
    np.testing.assert_allclose(np.asarray(out_ln), np.asarray(ref_ln),
                               rtol=1e-4, atol=1e-4)

    # 3) bf16 MXU feed (v6e/v7x recommendation), f32 accumulation — looser tolerance.
    out_bf16, _, _ = patch_embed(x, w_conv, b_conv, patch_size=patch_size,
                                 compute_dtype=jnp.bfloat16)
    out_bf16 = jax.block_until_ready(out_bf16)
    np.testing.assert_allclose(np.asarray(out_bf16), np.asarray(ref),
                               rtol=3e-2, atol=3e-2)

    # --- embed_dim = 128 (lane-dense without padding, no-pad code path) --------
    embed_dim2 = 128
    w_conv2 = (1.0 / np.sqrt(fan_in)) * jax.random.normal(
        kw2, (embed_dim2, in_chans, patch_size, patch_size), dtype=jnp.float32)
    b_conv2 = 0.05 * jax.random.normal(kb2, (embed_dim2,), dtype=jnp.float32)
    out2, _, _ = patch_embed(x, w_conv2, b_conv2, patch_size=patch_size)
    out2 = jax.block_until_ready(out2)
    ref2, _, _ = ref_patch_embed(x, w_conv2, b_conv2, patch_size=patch_size)
    np.testing.assert_allclose(np.asarray(out2), np.asarray(ref2),
                               rtol=1e-4, atol=1e-4)

    print("KERNEL_OK")
</pallas_src>

<mosaic_0001>
module attributes {stable_mosaic.version = 11 : i64} {
  func.func @_patch_embed_kernel(%arg0: i32, %arg1: memref<64x48xf32, #tpu.memory_space<vmem>>, %arg2: memref<48x128xf32, #tpu.memory_space<vmem>>, %arg3: memref<1x128xf32, #tpu.memory_space<vmem>>, %arg4: memref<64x128xf32, #tpu.memory_space<vmem>>) attributes {dimension_semantics = [#tpu.dimension_semantics<parallel>], iteration_bounds = array<i64: 2>, scalar_prefetch = 0 : i64, scratch_operands = 0 : i64, tpu.core_type = #tpu.core_type<tc>, window_params = [{transform_indices = @transform_0, window_bounds = array<i64: 64, 48>}, {pipeline_mode = #tpu.pipeline_mode<synchronous>, transform_indices = @transform_1, window_bounds = array<i64: 48, 128>}, {pipeline_mode = #tpu.pipeline_mode<synchronous>, transform_indices = @transform_2, window_bounds = array<i64: 1, 128>}, {transform_indices = @transform_3, window_bounds = array<i64: 64, 128>}]} {
    %c0 = arith.constant 0 : index
    %c0_0 = arith.constant 0 : index
    %0 = vector.load %arg1[%c0, %c0_0] : memref<64x48xf32, #tpu.memory_space<vmem>>, vector<64x48xf32>
    %c0_1 = arith.constant 0 : index
    %c0_2 = arith.constant 0 : index
    %1 = vector.load %arg2[%c0_1, %c0_2] : memref<48x128xf32, #tpu.memory_space<vmem>>, vector<48x128xf32>
    %cst = arith.constant dense<0.000000e+00> : vector<64x128xf32>
    %2 = tpu.matmul %0, %1, %cst {dimension_numbers = #tpu.dot_dimension_numbers<[1], [0], [0], [1], [0, 0, 1, 1], [], []>} : vector<64x48xf32>, vector<48x128xf32>, vector<64x128xf32> -> vector<64x128xf32>
    %c0_3 = arith.constant 0 : index
    %c0_4 = arith.constant 0 : index
    %3 = vector.load %arg3[%c0_3, %c0_4] : memref<1x128xf32, #tpu.memory_space<vmem>>, vector<1x128xf32>
    %4 = vector.broadcast %3 : vector<1x128xf32> to vector<64x128xf32>
    %5 = arith.addf %2, %4 : vector<64x128xf32>
    %c0_5 = arith.constant 0 : index
    %c0_6 = arith.constant 0 : index
    %6 = vector.load %arg4[%c0_5, %c0_6] : memref<64x128xf32, #tpu.memory_space<vmem>>, vector<64x128xf32>
    tpu.vector_store %arg4[%c0_5, %c0_6], %5 {strides = array<i32>} : memref<64x128xf32, #tpu.memory_space<vmem>>, vector<64x128xf32>,
    return
  }
  func.func @transform_0(%arg0: i32) -> (i32, i32) {
    %c0_i32 = arith.constant 0 : i32
    %c0_i32_0 = arith.constant 0 : i32
    return %arg0, %c0_i32 : i32, i32
  }
  func.func @transform_1(%arg0: i32) -> (i32, i32) {
    %c0_i32 = arith.constant 0 : i32
    %c0_i32_0 = arith.constant 0 : i32
    %c0_i32_1 = arith.constant 0 : i32
    return %c0_i32, %c0_i32_0 : i32, i32
  }
  func.func @transform_2(%arg0: i32) -> (i32, i32) {
    %c0_i32 = arith.constant 0 : i32
    %c0_i32_0 = arith.constant 0 : i32
    %c0_i32_1 = arith.constant 0 : i32
    return %c0_i32, %c0_i32_0 : i32, i32
  }
  func.func @transform_3(%arg0: i32) -> (i32, i32) {
    %c0_i32 = arith.constant 0 : i32
    %c0_i32_0 = arith.constant 0 : i32
    return %arg0, %c0_i32 : i32, i32
  }
}

</mosaic_0001>

<llo_original>
// kernel: tpu_custom_call.1
$region0: #{tpu_custom_call.1}
  #allocation0 [shape = 'u32[]', space=smem, size = 0x4, offset = 0x4, fixed_abs, tag = 'smem constant byte address 0x4 - core index']
  #allocation1 [shape = 'u32[72,128]{1,0:T(1,128)}', space=vmem, size = 0x9000, scoped, tag = 'internal scratch']
  %s0 = inlined_call_operand.vmem [shape: f32[128,48], index: 0, kind: input, shape index: {}]
  %s1 = inlined_call_operand.vmem [shape: f32[48,128], index: 1, kind: input, shape index: {}]
  %s2 = inlined_call_operand.vmem [shape: f32[1,128], index: 2, kind: input, shape index: {}]
  %s3 = inlined_call_operand.hbm [shape: f32[128,128], index: 3, kind: output, shape index: {}]
  %s4 = sld [smem:[#allocation0]]
  $region45: #{tpu_custom_call.1} parent=0
    _
  %s6 = ssub.s32 1, %s4
  %s7 = scalar_select 0, %s6, %s4
  $region1: #{tpu_custom_call.1} parent=0
    #allocation2 [shape = 'u8[65536]{0}', space=vmem, size = 0x10000, scoped, tag = 'output window, operand 0']
    #allocation3 [shape = 's32[2]{0}', space=sflag, size = 0x8, scoped, tag = 'scoped memory for tpu_custom_call.1']
    %8 = vsyncpa [#allocation3], 0
    %s9 = scalar_lea.sflag [#allocation3], 1
    %10 = vsyncpa %s9, 0
    loop: start=0, step=1, limit=4
    $region2: #{tpu_custom_call.1} parent=1 // loop_pre_header
      _
    $region3: #{tpu_custom_call.1} parent=1 // loop_header
      %s12 = sphi 0, %s16
      %p13 = scmp.ge.s32.totalorder %s12, 4
      %s22 = sphi 0, %s24
      %s25 = sphi 0, %s22
      %s26 = sphi 0, %s25
      %s42 = sphi 0, %s26
      %s46 = sphi 0, %s46
      %s48 = sphi 0, %s46
      %s49 = sphi 0, %s48
      %s63 = sphi 0, %s49
      %s67 = sphi 0, %s67
      %s69 = sphi 0, %s67
      %s70 = sphi 0, %s69
      %s84 = sphi 0, %s70
      %s90 = sphi 0, %s92
      %s93 = sphi 0, %s90
      %s94 = sphi 0, %s93
      %s110 = sphi 0, %s94
    $region4: #{tpu_custom_call.1} parent=1 // loop_header_branch
      %15 = sbr.rel (%p13) target = $region8
    $region5: #{tpu_custom_call.1} parent=1 // loop_body
      %s17 = ssub.s32 %s12, 1
      %s18 = ssub.s32 %s12, 2
      %s19 = sadd.s32 %s12, 1
      %s20 = ssub.s32 %s12, %s19
      %p21 = scmp.eq.s32.totalorder %s20, 0
      %s23 = sadd.s32 %s22, 1
      %s24 = scalar_select %p21, %s22, %s23
      %p27 = pneg %p21
      %p28 = scmp.eq.s32.totalorder %s12, 1
      %p29 = por %p27, %p28
      %p30 = scmp.ne.s32.totalorder %s22, %s25
      %p31 = scmp.eq.s32.totalorder %s12, 0
      %p32 = por %p30, %p31
      %p33 = scmp.ne.s32.totalorder %s22, %s25
      %p34 = scmp.eq.s32.totalorder %s17, 1
      %p35 = por %p33, %p34
      %p36 = scmp.ne.s32.totalorder %s25, %s26
      %p37 = scmp.eq.s32.totalorder %s17, 0
      %p38 = por %p36, %p37
      %p39 = scmp.ne.s32.totalorder %s25, %s26
      %p40 = scmp.eq.s32.totalorder %s18, 1
      %p41 = por %p39, %p40
      %p43 = scmp.ne.s32.totalorder %s26, %s42
      %p44 = scmp.eq.s32.totalorder %s18, 0
      %p45 = por %p43, %p44
      %s47 = sadd.s32 %s46, 1
      %p50 = scmp.eq.s32.totalorder %s12, 1
      %p51 = scmp.ne.s32.totalorder %s46, %s48
      %p52 = scmp.eq.s32.totalorder %s12, 0
      %p53 = por %p51, %p52
      %p54 = scmp.ne.s32.totalorder %s46, %s48
      %p55 = scmp.eq.s32.totalorder %s17, 1
      %p56 = por %p54, %p55
      %p57 = scmp.ne.s32.totalorder %s48, %s49
      %p58 = scmp.eq.s32.totalorder %s17, 0
      %p59 = por %p57, %p58
      %p60 = scmp.ne.s32.totalorder %s48, %s49
      %p61 = scmp.eq.s32.totalorder %s18, 1
      %p62 = por %p60, %p61
      %p64 = scmp.ne.s32.totalorder %s49, %s63
      %p65 = scmp.eq.s32.totalorder %s18, 0
      %p66 = por %p64, %p65
      %s68 = sadd.s32 %s67, 1
      %p71 = scmp.eq.s32.totalorder %s12, 1
      %p72 = scmp.ne.s32.totalorder %s67, %s69
      %p73 = scmp.eq.s32.totalorder %s12, 0
      %p74 = por %p72, %p73
      %p75 = scmp.ne.s32.totalorder %s67, %s69
      %p76 = scmp.eq.s32.totalorder %s17, 1
      %p77 = por %p75, %p76
      %p78 = scmp.ne.s32.totalorder %s69, %s70
      %p79 = scmp.eq.s32.totalorder %s17, 0
      %p80 = por %p78, %p79
      %p81 = scmp.ne.s32.totalorder %s69, %s70
      %p82 = scmp.eq.s32.totalorder %s18, 1
      %p83 = por %p81, %p82
      %p85 = scmp.ne.s32.totalorder %s70, %s84
      %p86 = scmp.eq.s32.totalorder %s18, 0
      %p87 = por %p85, %p86
      %s88 = ssub.s32 %s12, %s19
      %p89 = scmp.eq.s32.totalorder %s88, 0
      %s91 = sadd.s32 %s90, 1
      %s92 = scalar_select %p89, %s90, %s91
      %p95 = pneg %p89
      %p96 = scmp.eq.s32.totalorder %s12, 1
      %p97 = por %p95, %p96
      %p98 = scmp.ne.s32.totalorder %s90, %s93
      %p99 = scmp.eq.s32.totalorder %s12, 0
      %p100 = por %p98, %p99
      %p101 = scmp.ne.s32.totalorder %s90, %s93
      %p102 = scmp.eq.s32.totalorder %s17, 1
      %p103 = por %p101, %p102
      %p104 = scmp.ne.s32.totalorder %s93, %s94
      %p105 = scmp.eq.s32.totalorder %s17, 0
      %p106 = por %p104, %p105
      %p107 = scmp.ne.s32.totalorder %s93, %s94
      %p108 = scmp.eq.s32.totalorder %s18, 1
      %p109 = por %p107, %p108
      %p111 = scmp.ne.s32.totalorder %s94, %s110
      %p112 = scmp.eq.s32.totalorder %s18, 0
      %p113 = por %p111, %p112
      %p114 = scmp.le.s32.totalorder 1, %s12
      %p115 = scmp.lt.s32.totalorder %s12, 3
      %p116 = pnand %p114, %p115
      %p117 = pneg %p116
      // Predicated region
      $region9: #{tpu_custom_call.1} parent=5 // pred_check
        _
      $region10: #{tpu_custom_call.1} parent=5 // pred_check_branch
        %119 = sbr.rel (%p116) target = $region12
      $region11: #{tpu_custom_call.1} parent=5 // pred_region
        %s120 = ssub.s32 %s12, 1
        // Predicated region
        $region13: #{tpu_custom_call.1} parent=11 // pred_check
          %p121 = pneg %p59
        $region14: #{tpu_custom_call.1} parent=11 // pred_check_branch
          %123 = sbr.rel (%p121) target = $region16
        $region15: #{tpu_custom_call.1} parent=11 // pred_region
          _
        $region16: #{tpu_custom_call.1} parent=11 // pred_fallthru
          _
        // Predicated region
        $region17: #{tpu_custom_call.1} parent=11 // pred_check
          %p124 = pneg %p80
        $region18: #{tpu_custom_call.1} parent=11 // pred_check_branch
          %126 = sbr.rel (%p124) target = $region20
        $region19: #{tpu_custom_call.1} parent=11 // pred_region
          _
        $region20: #{tpu_custom_call.1} parent=11 // pred_fallthru
          _
      $region12: #{tpu_custom_call.1} parent=5 // pred_fallthru
        _
      %p127 = scmp.lt.s32.totalorder %s12, 2
      // Predicated region
      $region21: #{tpu_custom_call.1} parent=5 // pred_check
        %p128 = pneg %p127
      $region22: #{tpu_custom_call.1} parent=5 // pred_check_branch
        %130 = sbr.rel (%p128) target = $region24
      $region23: #{tpu_custom_call.1} parent=5 // pred_region
        // Predicated region
        $region25: #{tpu_custom_call.1} parent=23 // pred_check
          %p131 = pneg %p32
        $region26: #{tpu_custom_call.1} parent=23 // pred_check_branch
          %133 = sbr.rel (%p131) target = $region28
        $region27: #{tpu_custom_call.1} parent=23 // pred_region
          %s134 = smul.u32 8, %s12
          %p135 = scmp.lt.s32.totalorder %s134, 15
          %s136 = scalar_select %p135, %s134, 15
          %s137 = smul.addr %s136, 8
          %s138 = scalar_lea.vmem %s0, %s137
          %s139 = smul.u32 8, %s12
        $region28: #{tpu_custom_call.1} parent=23 // pred_fallthru
          _
      $region24: #{tpu_custom_call.1} parent=5 // pred_fallthru
        _
      %p140 = scmp.le.s32.totalorder 1, %s12
      %p141 = scmp.lt.s32.totalorder %s12, 3
      %p142 = pnand %p140, %p141
      %p143 = pneg %p142
      // Predicated region
      $region29: #{tpu_custom_call.1} parent=5 // pred_check
        _
      $region30: #{tpu_custom_call.1} parent=5 // pred_check_branch
        %145 = sbr.rel (%p142) target = $region32
      $region31: #{tpu_custom_call.1} parent=5 // pred_region
        %s146 = ssub.s32 %s12, 1
        %s147 = smul.u32 8, %s17
        %p148 = scmp.lt.s32.totalorder %s147, 15
        %s149 = scalar_select %p148, %s147, 15
        %s150 = smul.addr %s149, 8
        %s151 = scalar_lea.vmem %s0, %s150
        %p152 = pneg %p38
        %p153 = pneg %p35
        %p154 = pneg %p59
        %p155 = pneg %p56
        %p156 = pneg %p80
        %p157 = pneg %p77
        %p158 = pneg %p106
        %p159 = pneg %p103
        %s160 = sand.u32 %s93, 1
        %s161 = scalar_lea.sflag [#allocation3], %s160
        %s162 = sand.u32 %s93, 1
        %s163 = smul.addr %s162, 64
        %s164 = scalar_lea.vmem [#allocation2], %s163
        %s165 = smul.u32 8, %s17
        %p166 = scmp.lt.s32.totalorder %s165, 15
        %s167 = scalar_select %p166, %s165, 15
        %s168 = smul.addr %s167, 8
        %s169 = scalar_lea.vmem %s0, %s168
        %s170 = smul.u32 8, %s17
        %s171 = smul.u32 8, %s17
        %v172 = vld [vmem:[%s169] sm:$0xff]
        %v173 = vld [vmem:[%s169 + $0x8] sm:$0xff]
        %v174 = vld [vmem:[%s169 + $0x10] sm:$0xff]
        %v175 = vld [vmem:[%s169 + $0x18] sm:$0xff]
        %v176 = vld [vmem:[%s169 + $0x20] sm:$0xff]
        %v177 = vld [vmem:[%s169 + $0x28] sm:$0xff]
        %v178 = vld [vmem:[%s169 + $0x30] sm:$0xff]
        %v179 = vld [vmem:[%s169 + $0x38] sm:$0xff]
        %v180 = vld [vmem:[%s1] sm:$0xff]
        %v181 = vld [vmem:[%s1 + $0x8] sm:$0xff]
        %v182 = vld [vmem:[%s1 + $0x10] sm:$0xff]
        %v183 = vld [vmem:[%s1 + $0x18] sm:$0xff]
        %v184 = vld [vmem:[%s1 + $0x20] sm:$0xff]
        %v185 = vld [vmem:[%s1 + $0x28] sm:$0xff]
        %v186 = vld [vmem:[%s2] sm:$0x1]
        %v188 = vperm.slane %v186, 0
        %vm190 = vcmask 392192
        %v192 = vsel %vm190, %v172, 0
        %v195 = vsel %vm190, %v173, 0
        %v198 = vsel %vm190, %v174, 0
        %v201 = vsel %vm190, %v175, 0
        %v204 = vsel %vm190, %v176, 0
        %v207 = vsel %vm190, %v177, 0
        %v210 = vsel %vm190, %v178, 0
        %v213 = vsel %vm190, %v179, 0
        %215 = vmatpush.msra.mxu0 0.0
        %216 = vmatpush.msra.mxu0 0.0
        %217 = vmatpush.msra.mxu0 0.0
        %218 = vmatpush.msra.mxu0 0.0
        %219 = vmatpush.msra.mxu0 0.0
        %220 = vmatpush.msra.mxu0 0.0
        %221 = vmatpush.msra.mxu0 0.0
        %222 = vmatpush.msra.mxu0 0.0
        %223 = vmatpush.msra.mxu0 0.0
        %224 = vmatpush.msra.mxu0 0.0
        %225 = vmatpush.msra.mxu0 %v185
        %226 = vmatpush.msra.mxu0 %v184
        %227 = vmatpush.msra.mxu0 %v183
        %228 = vmatpush.msra.mxu0 %v182
        %229 = vmatpush.msra.mxu0 %v181
        %230 = vmatpush.msra.mxu0 %v180
        %231 = vmatmul.f32.gmra.mxu0 %v192
        %v232 = vpop.f32.mrf.mxu0
        %v233 = vadd.f32 %v188, %v232
        %234 = vmatmul.f32.gmra.mxu0 %v195
        %v235 = vpop.f32.mrf.mxu0
        %v236 = vadd.f32 %v188, %v235
        %237 = vmatmul.f32.gmra.mxu0 %v198
        %v238 = vpop.f32.mrf.mxu0
        %v239 = vadd.f32 %v188, %v238
        %240 = vmatmul.f32.gmra.mxu0 %v201
        %v241 = vpop.f32.mrf.mxu0
        %v242 = vadd.f32 %v188, %v241
        %243 = vmatmul.f32.gmra.mxu0 %v204
        %v244 = vpop.f32.mrf.mxu0
        %v245 = vadd.f32 %v188, %v244
        %246 = vmatmul.f32.gmra.mxu0 %v207
        %v247 = vpop.f32.mrf.mxu0
        %v248 = vadd.f32 %v188, %v247
        %249 = vmatmul.f32.gmra.mxu0 %v210
        %v250 = vpop.f32.mrf.mxu0
        %v251 = vadd.f32 %v188, %v250
        %252 = vmatmul.f32.gmra.mxu0 %v213
        %v253 = vpop.f32.mrf.mxu0
        %v254 = vadd.f32 %v188, %v253
        %255 = vdwg.mxu0
        %256 = vst [vmem:[%s164] sm:$0xff] %v233
        %257 = vst [vmem:[%s164 + $0x8] sm:$0xff] %v236
        %258 = vst [vmem:[%s164 + $0x10] sm:$0xff] %v239
        %259 = vst [vmem:[%s164 + $0x18] sm:$0xff] %v242
        %260 = vst [vmem:[%s164 + $0x20] sm:$0xff] %v245
        %261 = vst [vmem:[%s164 + $0x28] sm:$0xff] %v248
        %262 = vst [vmem:[%s164 + $0x30] sm:$0xff] %v251
        %263 = vst [vmem:[%s164 + $0x38] sm:$0xff] %v254
        %s264 = sand.u32 %s93, 1
        %s265 = scalar_lea.sflag [#allocation3], %s264
        %s266 = sand.u32 %s93, 1
        %s267 = smul.addr %s266, 64
        %s268 = scalar_lea.vmem [#allocation2], %s267
        // Predicated region
        $region33: #{tpu_custom_call.1} parent=31 // pred_check
          %p269 = pneg %p103
        $region34: #{tpu_custom_call.1} parent=31 // pred_check_branch
          %271 = sbr.rel (%p269) target = $region36
        $region35: #{tpu_custom_call.1} parent=31 // pred_region
          %s272 = smul.u32 8, %s17
          %274 = vsyncadd %s265, 0
          %s275 = smul.addr %s272, 8
          %s276 = scalar_lea.hbm %s3, %s275
          %s277 = sshll.u32 %s268, 4
          %s278 = int_to_ptr.vmem [resolvable:$true] %s277
          %s279 = sshll.u32 %s276, 4
          %s280 = int_to_ptr.hbm [resolvable:$true] %s279
          %285 = dma.vmem_to_hbm [thread:$0]  %s278, 1024, %s280, %s265, 128, 128, 8
        $region36: #{tpu_custom_call.1} parent=31 // pred_fallthru
          _
      $region32: #{tpu_custom_call.1} parent=5 // pred_fallthru
        _
      %p286 = scmp.le.s32.totalorder 2, %s12
      // Predicated region
      $region37: #{tpu_custom_call.1} parent=5 // pred_check
        %p287 = pneg %p286
      $region38: #{tpu_custom_call.1} parent=5 // pred_check_branch
        %289 = sbr.rel (%p287) target = $region40
      $region39: #{tpu_custom_call.1} parent=5 // pred_region
        %s290 = ssub.s32 %s12, 2
        // Predicated region
        $region41: #{tpu_custom_call.1} parent=39 // pred_check
          %p291 = pneg %p109
        $region42: #{tpu_custom_call.1} parent=39 // pred_check_branch
          %293 = sbr.rel (%p291) target = $region44
        $region43: #{tpu_custom_call.1} parent=39 // pred_region
          %s294 = sand.u32 %s94, 1
          %s295 = scalar_lea.sflag [#allocation3], %s294
          %s296 = sand.u32 %s94, 1
          %s297 = smul.addr %s296, 64
          %s298 = scalar_lea.vmem [#allocation2], %s297
          %300 = dma.done %s295, 1024
        $region44: #{tpu_custom_call.1} parent=39 // pred_fallthru
          _
      $region40: #{tpu_custom_call.1} parent=5 // pred_fallthru
        _
    $region6: #{tpu_custom_call.1} parent=1 // loop_footer
      %s16 = sadd.s32 1, %s12
    $region7: #{tpu_custom_call.1} parent=1 // loop_footer_branch
      %11 = sbr.rel target = $region3
    $region8: #{tpu_custom_call.1} parent=1 // loop_exit
      _
    %301 = vsyncpa [#allocation3], 1
    %s302 = scalar_lea.sflag [#allocation3], 1
    %303 = vsyncpa %s302, 1

</llo_original>
